<compile_context>
chip_gen: v6e
topology: v6e:2x2x1
jax: 0.10.0
libtpu: 0.0.40
codegen_flags: <defaults>
</compile_context>

<pallas_src>
import jax
import jax.numpy as jnp
from jax.experimental import pallas as pl
from jax.experimental.pallas import tpu as pltpu


# ----------------------------------------------------------------------------
# Kernel
# ----------------------------------------------------------------------------
def _pad_lanes(x, target):
    """Zero-pad the last (lane) dim of a value up to `target` (lane-dense vst)."""
    pad = target - x.shape[-1]
    if pad == 0:
        return x
    zeros = jnp.zeros(x.shape[:-1] + (pad,), x.dtype)
    return jnp.concatenate([x, zeros], axis=-1)


def _soft_attention_body(feats_ref, key_ref, f_ref, wvx_ref, wvf_ref,
                         wh_ref, bias_ref, wa_ref, att_ref, alpha_ref):
    tb, n, fdim = feats_ref.shape
    a = wh_ref.shape[-1]

    feats3 = feats_ref[...]                               # (TB, N, F)
    # Free when N % 8 == 0 (whole sublane tiles per batch row); otherwise the
    # compiler inserts a VMEM copy of the tile (correct, accounted in budget).
    feats2 = feats3.reshape(tb * n, fdim)                 # (TB*N, F)

    # v projection: big-M matmul on the MXU, fp32 accumulation.
    v = jnp.dot(feats2, wvx_ref[...], preferred_element_type=jnp.float32)
    if f_ref is not None:
        f2 = f_ref[...].reshape(tb * n, fdim)
        v = v + jnp.dot(f2, wvf_ref[...], preferred_element_type=jnp.float32)

    # h projection for all TB rows at once, with the folded (wv_b + wh_b) bias.
    h = jnp.dot(key_ref[...], wh_ref[...],
                preferred_element_type=jnp.float32) + bias_ref[...]   # (TB, A)

    t = jnp.tanh(v.reshape(tb, n, a) + h[:, None, :])     # (TB, N, A) fp32

    # wa (A -> 1) as VPU multiply + lane reduce; result is already (TB, N).
    e = jnp.sum(t * wa_ref[...].reshape(1, 1, a), axis=-1)            # (TB, N)

    # Softmax over feat_num (lane axis).
    e = e - jnp.max(e, axis=-1, keepdims=True)
    p = jnp.exp(e)
    s = jnp.sum(p, axis=-1, keepdims=True)
    inv = pl.reciprocal(s, approx=True)
    inv = inv * (2.0 - s * inv)          # one Newton step -> fp32-accurate
    alpha = p * inv                                        # (TB, N) fp32

    # att = sum_n alpha[b,n] * feats[b,n,:] as a fp32 VPU multiply + XLU
    # sublane reduce: no M=1 MXU matmuls, no bf16 downcast of alpha.
    att = jnp.sum(alpha[:, :, None] * feats3.astype(jnp.float32), axis=1)

    # Lane-dense stores (last dim padded to >=128 in the wrapper).
    att_ref[...] = _pad_lanes(att, att_ref.shape[-1]).astype(att_ref.dtype)
    alpha_ref[...] = _pad_lanes(alpha, alpha_ref.shape[-1])


def _soft_attention_kernel_with_f(feats_ref, key_ref, f_ref, wvx_ref, wvf_ref,
                                  wh_ref, bias_ref, wa_ref, att_ref, alpha_ref):
    _soft_attention_body(feats_ref, key_ref, f_ref, wvx_ref, wvf_ref,
                         wh_ref, bias_ref, wa_ref, att_ref, alpha_ref)


def _soft_attention_kernel_no_f(feats_ref, key_ref, wvx_ref,
                                wh_ref, bias_ref, wa_ref, att_ref, alpha_ref):
    _soft_attention_body(feats_ref, key_ref, None, wvx_ref, None,
                         wh_ref, bias_ref, wa_ref, att_ref, alpha_ref)


# ----------------------------------------------------------------------------
# Wrapper helpers
# ----------------------------------------------------------------------------
def prepare_soft_attention_weights(params, feat_size, *, has_f,
                                   compute_dtype=None):
    """One-time weight prep (hoist out of the per-call/per-step path).

    Transposes to (in, out), splits wv so no (feats, f) concat is needed, and
    folds wh_b into the v-projection bias.  wa and the bias stay fp32.
    """
    F = feat_size
    if has_f:
        wvx = params["wv_w"][:, :F].T                      # (F, A)
        wvf = params["wv_w"][:, F:].T                      # (F, A)
        bias = (params["wv_b"] + params["wh_b"]).reshape(1, -1)
    else:
        wvx = params["wv2_w"].T                            # (F, A)
        wvf = None
        bias = (params["wv2_b"] + params["wh_b"]).reshape(1, -1)
    wh = params["wh_w"].T                                  # (H, A)
    wa = params["wa_w"].reshape(1, -1).astype(jnp.float32)  # VPU reduce, fp32
    bias = bias.astype(jnp.float32)

    if compute_dtype is not None:
        wvx = wvx.astype(compute_dtype)
        wh = wh.astype(compute_dtype)
        if has_f:
            wvf = wvf.astype(compute_dtype)

    prepared = dict(wvx=wvx, wh=wh, bias=bias, wa=wa)
    if has_f:
        prepared["wvf"] = wvf
    return prepared


def _tpu_vmem_and_cores():
    """Generation-aware VMEM capacity (per core) and TensorCore count."""
    vmem = 64 << 20                      # conservative default (v7x per-TC)
    try:
        info = pltpu.get_tpu_info()
        v = (getattr(info, "vmem_capacity_bytes", None)
             or getattr(info, "vmem_size_bytes", None))
        if v:
            vmem = int(v)
    except Exception:
        pass
    # v7x exposes ~64 MiB per TensorCore and has 2 TCs that can split a
    # "parallel" grid axis; v5e/v6e have 128 MiB and a single TC.
    n_cores = 2 if vmem <= (64 << 20) else 1
    return vmem, n_cores


def _choose_tb(B, cap):
    """Largest batch tile <= cap; prefer divisors of B (no partial tail) and
    keep tb a multiple of 8 (sublane-aligned 2-D blocks) when tb < B."""
    cap = max(1, min(int(cap), B))
    if B <= cap:
        return B
    t8 = (cap // 8) * 8
    if t8 >= 8:
        best = 0
        for d in range(t8, 0, -8):
            if B % d == 0:
                best = d
                break
        if best and best * 2 >= t8:
            return best
        return t8            # partial tail tile; Pallas masks OOB writes
    return cap


# ----------------------------------------------------------------------------
# Public entry point
# ----------------------------------------------------------------------------
def soft_attention_pallas(params, feats, key, f=None, *,
                          compute_dtype=None, batch_tile=None, prepared=None):
    """Pallas forward of SoftAttention.

    params: dict with wh_w (A,H), wh_b (A,), wv_w (A,2F), wv_b (A,),
            wv2_w (A,F), wv2_b (A,), wa_w (1,A)   -- PyTorch (out,in) layout.
    compute_dtype: optional MXU operand dtype (bf16 is a win on v5e/v6e/v7x;
            accumulation, tanh, softmax and the att reduction stay fp32).
    prepared: optional result of prepare_soft_attention_weights() (hoisted).
    Returns (att_feats (B,F) in feats.dtype, alpha (B,N) in fp32).
    """
    B, N, F = feats.shape
    H = key.shape[-1]
    out_dtype = feats.dtype
    has_f = f is not None

    if prepared is None:
        prepared = prepare_soft_attention_weights(
            params, F, has_f=has_f, compute_dtype=compute_dtype)
    wvx = prepared["wvx"]
    wvf = prepared.get("wvf")
    wh = prepared["wh"]
    bias = prepared["bias"]
    wa = prepared["wa"]
    A = wh.shape[-1]

    feats_in, f_in, key_in = feats, f, key
    if compute_dtype is not None:
        feats_in = feats_in.astype(compute_dtype)
        key_in = key_in.astype(compute_dtype)
        if has_f:
            f_in = f_in.astype(compute_dtype)

    # Lane-dense output widths (avoid masked partial stores for tiny N / F).
    F_out = F if F >= 128 else 128
    N_out = N if N >= 128 else 128

    # --- generation-aware VMEM budget & batch tile ---------------------------
    vmem_cap, n_cores = _tpu_vmem_and_cores()
    vmem_limit = int(min(vmem_cap * 3 // 4, 96 << 20))     # 96 MiB v5e/v6e, 48 MiB v7x
    budget = int(vmem_limit * 0.6)                         # per-step working set

    if batch_tile is None:
        nf = 2 if has_f else 1
        in_isz = jnp.dtype(feats_in.dtype).itemsize
        out_isz = jnp.dtype(out_dtype).itemsize
        per_row = (
            2 * nf * N * F * in_isz              # double-buffered feats (+f)
            + 2 * H * in_isz                     # double-buffered key
            + 2 * (F_out * out_isz + N_out * 4)  # double-buffered outputs
            + N * F * (in_isz + 4)               # flatten copy + fp32 att temp
            + 3 * N * A * 4                      # v / inputs / tanh fp32 temps
            + (N + F) * 4                        # e, alpha, att rows
        )
        const_bytes = 2 * ((nf * F + H) * A * in_isz + 2 * A * 4)
        avail = max(per_row, budget - const_bytes)
        tb_cap = max(1, avail // per_row)
        # Keep grid_b >= n_cores on 2-TC parts so the parallel axis core-splits.
        if n_cores > 1 and B >= 2 * n_cores:
            tb_cap = min(tb_cap, pl.cdiv(B, n_cores))
        tb = _choose_tb(B, tb_cap)
    else:
        tb = max(1, min(int(batch_tile), B))

    grid_b = pl.cdiv(B, tb)                # no wrapper padding; tail is masked

    feat_spec = pl.BlockSpec((tb, N, F), lambda b: (b, 0, 0))
    key_spec = pl.BlockSpec((tb, H), lambda b: (b, 0))
    w_fa_spec = pl.BlockSpec((F, A), lambda b: (0, 0))
    w_ha_spec = pl.BlockSpec((H, A), lambda b: (0, 0))
    row_a_spec = pl.BlockSpec((1, A), lambda b: (0, 0))

    if has_f:
        kernel = _soft_attention_kernel_with_f
        inputs = (feats_in, key_in, f_in, wvx, wvf, wh, bias, wa)
        in_specs = [feat_spec, key_spec, feat_spec, w_fa_spec, w_fa_spec,
                    w_ha_spec, row_a_spec, row_a_spec]
    else:
        kernel = _soft_attention_kernel_no_f
        inputs = (feats_in, key_in, wvx, wh, bias, wa)
        in_specs = [feat_spec, key_spec, w_fa_spec,
                    w_ha_spec, row_a_spec, row_a_spec]

    att, alpha = pl.pallas_call(
        kernel,
        out_shape=(
            jax.ShapeDtypeStruct((B, F_out), out_dtype),
            jax.ShapeDtypeStruct((B, N_out), jnp.float32),   # alpha kept fp32
        ),
        grid_spec=pltpu.PrefetchScalarGridSpec(
            num_scalar_prefetch=0,
            grid=(grid_b,),
            in_specs=in_specs,
            out_specs=[
                pl.BlockSpec((tb, F_out), lambda b: (b, 0)),
                pl.BlockSpec((tb, N_out), lambda b: (b, 0)),
            ],
        ),
        compiler_params=pltpu.CompilerParams(
            dimension_semantics=("parallel",),
            vmem_limit_bytes=vmem_limit),
    )(*inputs)

    if F_out != F:
        att = att[:, :F]
    if N_out != N:
        alpha = alpha[:, :N]
    return att, alpha


# ----------------------------------------------------------------------------
# Reference + init
# ----------------------------------------------------------------------------
def soft_attention_ref(params, feats, key, f=None):
    """Pure-JAX reference matching the PyTorch forward."""
    if f is not None:
        v = jnp.einsum("bnd,ad->bna",
                       jnp.concatenate([feats, f], -1), params["wv_w"]) + params["wv_b"]
    else:
        v = jnp.einsum("bnd,ad->bna", feats, params["wv2_w"]) + params["wv2_b"]
    h = key @ params["wh_w"].T + params["wh_b"]          # (B, A)
    inputs = h[:, None, :] + v                           # (B, N, A)
    e = jnp.einsum("bna,oa->bno", jnp.tanh(inputs), params["wa_w"])[..., 0]
    alpha = jax.nn.softmax(e, axis=1)                    # (B, N)
    att = jnp.einsum("bn,bnf->bf", alpha, feats)         # (B, F)
    return att, alpha


def init_params(rng, feat_size, hidden_size, att_size):
    """Deterministic nn.Linear-style init (uniform +-1/sqrt(fan_in))."""
    def linear(key_, out_f, in_f, bias=True):
        kw, kb = jax.random.split(key_)
        bound = 1.0 / (in_f ** 0.5)
        w = jax.random.uniform(kw, (out_f, in_f), jnp.float32, -bound, bound)
        b = (jax.random.uniform(kb, (out_f,), jnp.float32, -bound, bound)
             if bias else None)
        return w, b

    k1, k2, k3, k4 = jax.random.split(rng, 4)
    wh_w, wh_b = linear(k1, att_size, hidden_size)
    wv_w, wv_b = linear(k2, att_size, feat_size * 2)
    wv2_w, wv2_b = linear(k3, att_size, feat_size)
    wa_w, _ = linear(k4, 1, att_size, bias=False)
    return dict(wh_w=wh_w, wh_b=wh_b, wv_w=wv_w, wv_b=wv_b,
                wv2_w=wv2_w, wv2_b=wv2_b, wa_w=wa_w)


if __name__ == "__main__":
    # TODO(synk): dropout=0.1 in __init__ is never used by forward(); not implemented.
    B, N, F, H, A = 2, 8, 32, 32, 16
    root = jax.random.PRNGKey(0)
    kp, kf, kf2, kk, kf3, kk3 = jax.random.split(root, 6)

    params = init_params(kp, feat_size=F, hidden_size=H, att_size=A)
    feats = jax.random.normal(kf, (B, N, F), jnp.float32)
    f_extra = jax.random.normal(kf2, (B, N, F), jnp.float32)
    key = jax.random.normal(kk, (B, H), jnp.float32)

    # Path 1: f is None  -> wv2 branch (fp32)
    att1, alpha1 = soft_attention_pallas(params, feats, key, f=None)
    jax.block_until_ready((att1, alpha1))
    r_att1, r_alpha1 = soft_attention_ref(params, feats, key, f=None)
    assert att1.shape == (B, F) and alpha1.shape == (B, N)
    assert jnp.allclose(att1, r_att1, atol=1e-4, rtol=1e-4)
    assert jnp.allclose(alpha1, r_alpha1, atol=1e-4, rtol=1e-4)

    # Path 2: f provided -> split-wv branch, no concat (fp32)
    att2, alpha2 = soft_attention_pallas(params, feats, key, f=f_extra)
    jax.block_until_ready((att2, alpha2))
    r_att2, r_alpha2 = soft_attention_ref(params, feats, key, f=f_extra)
    assert jnp.allclose(att2, r_att2, atol=1e-4, rtol=1e-4)
    assert jnp.allclose(alpha2, r_alpha2, atol=1e-4, rtol=1e-4)

    # Path 3: bf16 MXU operands (beneficial on v5e/v6e/v7x), fp32 accumulation,
    # weight prep hoisted out of the per-call path.
    prep_bf16 = prepare_soft_attention_weights(params, F, has_f=True,
                                               compute_dtype=jnp.bfloat16)
    att3, alpha3 = soft_attention_pallas(params, feats, key, f=f_extra,
                                         compute_dtype=jnp.bfloat16,
                                         prepared=prep_bf16)
    jax.block_until_ready((att3, alpha3))
    assert att3.dtype == feats.dtype and alpha3.dtype == jnp.float32
    assert jnp.allclose(att3, r_att2, atol=5e-2, rtol=5e-2)
    assert jnp.allclose(alpha3, r_alpha2, atol=5e-2, rtol=5e-2)

    # Path 4: non-dividing batch tile (B=3, tb=2) -> exercises the masked
    # tail tile instead of a wrapper-side jnp.pad of feats/f/key.
    B3 = 3
    feats3b = jax.random.normal(kf3, (B3, N, F), jnp.float32)
    key3b = jax.random.normal(kk3, (B3, H), jnp.float32)
    att4, alpha4 = soft_attention_pallas(params, feats3b, key3b, f=None,
                                         batch_tile=2)
    jax.block_until_ready((att4, alpha4))
    r_att4, r_alpha4 = soft_attention_ref(params, feats3b, key3b, f=None)
    assert att4.shape == (B3, F) and alpha4.shape == (B3, N)
    assert jnp.allclose(att4, r_att4, atol=1e-4, rtol=1e-4)
    assert jnp.allclose(alpha4, r_alpha4, atol=1e-4, rtol=1e-4)

    print("KERNEL_OK")
</pallas_src>

<mosaic_0001>
module attributes {stable_mosaic.version = 11 : i64} {
  func.func @_soft_attention_kernel_no_f(%arg0: i32, %arg1: memref<2x8x32xf32, #tpu.memory_space<vmem>>, %arg2: memref<2x32xf32, #tpu.memory_space<vmem>>, %arg3: memref<32x16xf32, #tpu.memory_space<vmem>>, %arg4: memref<32x16xf32, #tpu.memory_space<vmem>>, %arg5: memref<1x16xf32, #tpu.memory_space<vmem>>, %arg6: memref<1x16xf32, #tpu.memory_space<vmem>>, %arg7: memref<2x128xf32, #tpu.memory_space<vmem>>, %arg8: memref<2x128xf32, #tpu.memory_space<vmem>>) attributes {dimension_semantics = [#tpu.dimension_semantics<parallel>], iteration_bounds = array<i64: 1>, scalar_prefetch = 0 : i64, scratch_operands = 0 : i64, tpu.core_type = #tpu.core_type<tc>, window_params = [{transform_indices = @transform_0, window_bounds = array<i64: 2, 8, 32>}, {transform_indices = @transform_1, window_bounds = array<i64: 2, 32>}, {pipeline_mode = #tpu.pipeline_mode<synchronous>, transform_indices = @transform_2, window_bounds = array<i64: 32, 16>}, {pipeline_mode = #tpu.pipeline_mode<synchronous>, transform_indices = @transform_3, window_bounds = array<i64: 32, 16>}, {pipeline_mode = #tpu.pipeline_mode<synchronous>, transform_indices = @transform_4, window_bounds = array<i64: 1, 16>}, {pipeline_mode = #tpu.pipeline_mode<synchronous>, transform_indices = @transform_5, window_bounds = array<i64: 1, 16>}, {transform_indices = @transform_6, window_bounds = array<i64: 2, 128>}, {transform_indices = @transform_7, window_bounds = array<i64: 2, 128>}]} {
    %c0 = arith.constant 0 : index
    %c0_0 = arith.constant 0 : index
    %c0_1 = arith.constant 0 : index
    %0 = vector.load %arg1[%c0, %c0_0, %c0_1] : memref<2x8x32xf32, #tpu.memory_space<vmem>>, vector<2x8x32xf32>
    %1 = vector.shape_cast %0 : vector<2x8x32xf32> to vector<16x32xf32>
    %c0_2 = arith.constant 0 : index
    %c0_3 = arith.constant 0 : index
    %2 = vector.load %arg3[%c0_2, %c0_3] : memref<32x16xf32, #tpu.memory_space<vmem>>, vector<32x16xf32>
    %cst = arith.constant dense<0.000000e+00> : vector<16x16xf32>
    %3 = tpu.matmul %1, %2, %cst {dimension_numbers = #tpu.dot_dimension_numbers<[1], [0], [0], [1], [0, 0, 1, 1], [], []>} : vector<16x32xf32>, vector<32x16xf32>, vector<16x16xf32> -> vector<16x16xf32>
    %c0_4 = arith.constant 0 : index
    %c0_5 = arith.constant 0 : index
    %4 = vector.load %arg2[%c0_4, %c0_5] : memref<2x32xf32, #tpu.memory_space<vmem>>, vector<2x32xf32>
    %c0_6 = arith.constant 0 : index
    %c0_7 = arith.constant 0 : index
    %5 = vector.load %arg4[%c0_6, %c0_7] : memref<32x16xf32, #tpu.memory_space<vmem>>, vector<32x16xf32>
    %cst_8 = arith.constant dense<0.000000e+00> : vector<2x16xf32>
    %6 = tpu.matmul %4, %5, %cst_8 {dimension_numbers = #tpu.dot_dimension_numbers<[1], [0], [0], [1], [0, 0, 1, 1], [], []>} : vector<2x32xf32>, vector<32x16xf32>, vector<2x16xf32> -> vector<2x16xf32>
    %c0_9 = arith.constant 0 : index
    %c0_10 = arith.constant 0 : index
    %7 = vector.load %arg5[%c0_9, %c0_10] : memref<1x16xf32, #tpu.memory_space<vmem>>, vector<1x16xf32>
    %8 = vector.broadcast %7 : vector<1x16xf32> to vector<2x16xf32>
    %9 = arith.addf %6, %8 : vector<2x16xf32>
    %10 = vector.shape_cast %3 : vector<16x16xf32> to vector<2x8x16xf32>
    %11 = vector.shape_cast %9 : vector<2x16xf32> to vector<2x1x16xf32>
    %12 = vector.broadcast %11 : vector<2x1x16xf32> to vector<2x8x16xf32>
    %13 = arith.addf %10, %12 : vector<2x8x16xf32>
    %14 = math.tanh %13 : vector<2x8x16xf32>
    %c0_11 = arith.constant 0 : index
    %c0_12 = arith.constant 0 : index
    %15 = vector.load %arg6[%c0_11, %c0_12] : memref<1x16xf32, #tpu.memory_space<vmem>>, vector<1x16xf32>
    %16 = vector.shape_cast %15 : vector<1x16xf32> to vector<1x1x16xf32>
    %17 = vector.broadcast %16 : vector<1x1x16xf32> to vector<2x8x16xf32>
    %18 = arith.mulf %14, %17 : vector<2x8x16xf32>
    %cst_13 = arith.constant dense<0.000000e+00> : vector<2x8xf32>
    %19 = vector.multi_reduction <add>, %18, %cst_13 [2] : vector<2x8x16xf32> to vector<2x8xf32>
    %cst_14 = arith.constant dense<0xFF800000> : vector<2xf32>
    %20 = vector.multi_reduction <maximumf>, %19, %cst_14 [1] : vector<2x8xf32> to vector<2xf32>
    %21 = vector.shape_cast %20 : vector<2xf32> to vector<2x1xf32>
    %22 = vector.broadcast %21 : vector<2x1xf32> to vector<2x8xf32>
    %23 = arith.subf %19, %22 : vector<2x8xf32>
    %24 = math.exp %23 : vector<2x8xf32>
    %cst_15 = arith.constant dense<0.000000e+00> : vector<2xf32>
    %25 = vector.multi_reduction <add>, %24, %cst_15 [1] : vector<2x8xf32> to vector<2xf32>
    %26 = vector.shape_cast %25 : vector<2xf32> to vector<2x1xf32>
    %27 = tpu.reciprocal %26 {approx = true} : vector<2x1xf32> -> vector<2x1xf32>
    %28 = arith.mulf %26, %27 : vector<2x1xf32>
    %cst_16 = arith.constant 2.000000e+00 : f32
    %29 = vector.broadcast %cst_16 : f32 to vector<2x1xf32>
    %30 = arith.subf %29, %28 : vector<2x1xf32>
    %31 = arith.mulf %27, %30 : vector<2x1xf32>
    %32 = vector.broadcast %31 : vector<2x1xf32> to vector<2x8xf32>
    %33 = arith.mulf %24, %32 : vector<2x8xf32>
    %34 = vector.shape_cast %33 : vector<2x8xf32> to vector<2x8x1xf32>
    %35 = vector.broadcast %34 : vector<2x8x1xf32> to vector<2x8x32xf32>
    %36 = arith.mulf %35, %0 : vector<2x8x32xf32>
    %cst_17 = arith.constant dense<0.000000e+00> : vector<2x32xf32>
    %37 = vector.multi_reduction <add>, %36, %cst_17 [1] : vector<2x8x32xf32> to vector<2x32xf32>
    %cst_18 = arith.constant 0.000000e+00 : f32
    %38 = vector.broadcast %cst_18 : f32 to vector<2x96xf32>
    %39 = tpu.concatenate %37, %38 in 1 : vector<2x32xf32>, vector<2x96xf32> -> vector<2x128xf32>
    %c0_19 = arith.constant 0 : index
    %c0_20 = arith.constant 0 : index
    %40 = vector.load %arg7[%c0_19, %c0_20] : memref<2x128xf32, #tpu.memory_space<vmem>>, vector<2x128xf32>
    tpu.vector_store %arg7[%c0_19, %c0_20], %39 {strides = array<i32>} : memref<2x128xf32, #tpu.memory_space<vmem>>, vector<2x128xf32>,
    %cst_21 = arith.constant 0.000000e+00 : f32
    %41 = vector.broadcast %cst_21 : f32 to vector<2x120xf32>
    %42 = tpu.concatenate %33, %41 in 1 : vector<2x8xf32>, vector<2x120xf32> -> vector<2x128xf32>
    %c0_22 = arith.constant 0 : index
    %c0_23 = arith.constant 0 : index
    %43 = vector.load %arg8[%c0_22, %c0_23] : memref<2x128xf32, #tpu.memory_space<vmem>>, vector<2x128xf32>
    tpu.vector_store %arg8[%c0_22, %c0_23], %42 {strides = array<i32>} : memref<2x128xf32, #tpu.memory_space<vmem>>, vector<2x128xf32>,
    return
  }
  func.func @transform_0(%arg0: i32) -> (i32, i32, i32) {
    %c0_i32 = arith.constant 0 : i32
    %c0_i32_0 = arith.constant 0 : i32
    %c0_i32_1 = arith.constant 0 : i32
    return %arg0, %c0_i32, %c0_i32_0 : i32, i32, i32
  }
  func.func @transform_1(%arg0: i32) -> (i32, i32) {
    %c0_i32 = arith.constant 0 : i32
    %c0_i32_0 = arith.constant 0 : i32
    return %arg0, %c0_i32 : i32, i32
  }
  func.func @transform_2(%arg0: i32) -> (i32, i32) {
    %c0_i32 = arith.constant 0 : i32
    %c0_i32_0 = arith.constant 0 : i32
    %c0_i32_1 = arith.constant 0 : i32
    return %c0_i32, %c0_i32_0 : i32, i32
  }
  func.func @transform_3(%arg0: i32) -> (i32, i32) {
    %c0_i32 = arith.constant 0 : i32
    %c0_i32_0 = arith.constant 0 : i32
    %c0_i32_1 = arith.constant 0 : i32
    return %c0_i32, %c0_i32_0 : i32, i32
  }
  func.func @transform_4(%arg0: i32) -> (i32, i32) {
    %c0_i32 = arith.constant 0 : i32
    %c0_i32_0 = arith.constant 0 : i32
    %c0_i32_1 = arith.constant 0 : i32
    return %c0_i32, %c0_i32_0 : i32, i32
  }
  func.func @transform_5(%arg0: i32) -> (i32, i32) {
    %c0_i32 = arith.constant 0 : i32
    %c0_i32_0 = arith.constant 0 : i32
    %c0_i32_1 = arith.constant 0 : i32
    return %c0_i32, %c0_i32_0 : i32, i32
  }
  func.func @transform_6(%arg0: i32) -> (i32, i32) {
    %c0_i32 = arith.constant 0 : i32
    %c0_i32_0 = arith.constant 0 : i32
    return %arg0, %c0_i32 : i32, i32
  }
  func.func @transform_7(%arg0: i32) -> (i32, i32) {
    %c0_i32 = arith.constant 0 : i32
    %c0_i32_0 = arith.constant 0 : i32
    return %arg0, %c0_i32 : i32, i32
  }
}

</mosaic_0001>

<llo_original>
// kernel: tpu_custom_call.1
$region0: #{tpu_custom_call.1}
  #allocation0 [shape = 'u32[]', space=smem, size = 0x4, offset = 0x4, fixed_abs, tag = 'smem constant byte address 0x4 - core index']
  #allocation1 [shape = 'u32[144,128]{1,0:T(1,128)}', space=vmem, size = 0x12000, scoped, tag = 'internal scratch']
  %s0 = inlined_call_operand.vmem [shape: f32[2,8,32], index: 0, kind: input, shape index: {}]
  %s1 = inlined_call_operand.vmem [shape: f32[2,32], index: 1, kind: input, shape index: {}]
  %s2 = inlined_call_operand.vmem [shape: f32[32,16], index: 2, kind: input, shape index: {}]
  %s3 = inlined_call_operand.vmem [shape: f32[32,16], index: 3, kind: input, shape index: {}]
  %s4 = inlined_call_operand.vmem [shape: f32[1,16], index: 4, kind: input, shape index: {}]
  %s5 = inlined_call_operand.vmem [shape: f32[1,16], index: 5, kind: input, shape index: {}]
  %s6 = inlined_call_operand.hbm [shape: f32[2,128], index: 6, kind: output, shape index: {0}]
  %s7 = inlined_call_operand.hbm [shape: f32[2,128], index: 7, kind: output, shape index: {1}]
  %8 = xla_tuple %s6, %s7
  %s9 = sld [smem:[#allocation0]]
  $region42: #{tpu_custom_call.1} parent=0
    _
  %s11 = ssub.s32 1, %s9
  %s12 = scalar_select 0, %s11, %s9
  $region1: #{tpu_custom_call.1} parent=0
    #allocation2 [shape = 'u8[1024]{0}', space=vmem, size = 0x400, scoped, tag = 'output window, operand 0, single buffered']
    #allocation3 [shape = 's32[1]{0}', space=sflag, size = 0x4, scoped, tag = 'scoped memory for tpu_custom_call.1']
    #allocation4 [shape = 'u8[1024]{0}', space=vmem, size = 0x400, scoped, tag = 'output window, operand 1, single buffered']
    #allocation5 [shape = 's32[1]{0}', space=sflag, size = 0x4, scoped, tag = 'scoped memory for tpu_custom_call.1']
    %13 = vsyncpa [#allocation3], 0
    %14 = vsyncpa [#allocation5], 0
    // Predicated region
    $region2: #{tpu_custom_call.1} parent=1 // pred_check
      _
    $region3: #{tpu_custom_call.1} parent=1 // pred_check_branch
      %16 = sbr.rel (0) target = $region5
    $region4: #{tpu_custom_call.1} parent=1 // pred_region
      _
    $region5: #{tpu_custom_call.1} parent=1 // pred_fallthru
      _
    // Predicated region
    $region6: #{tpu_custom_call.1} parent=1 // pred_check
      _
    $region7: #{tpu_custom_call.1} parent=1 // pred_check_branch
      %18 = sbr.rel (0) target = $region9
    $region8: #{tpu_custom_call.1} parent=1 // pred_region
      _
    $region9: #{tpu_custom_call.1} parent=1 // pred_fallthru
      _
    // Predicated region
    $region10: #{tpu_custom_call.1} parent=1 // pred_check
      _
    $region11: #{tpu_custom_call.1} parent=1 // pred_check_branch
      %20 = sbr.rel (0) target = $region13
    $region12: #{tpu_custom_call.1} parent=1 // pred_region
      _
    $region13: #{tpu_custom_call.1} parent=1 // pred_fallthru
      _
    // Predicated region
    $region14: #{tpu_custom_call.1} parent=1 // pred_check
      _
    $region15: #{tpu_custom_call.1} parent=1 // pred_check_branch
      %22 = sbr.rel (0) target = $region17
    $region16: #{tpu_custom_call.1} parent=1 // pred_region
      _
    $region17: #{tpu_custom_call.1} parent=1 // pred_fallthru
      _
    // Predicated region
    $region18: #{tpu_custom_call.1} parent=1 // pred_check
      _
    $region19: #{tpu_custom_call.1} parent=1 // pred_check_branch
      %24 = sbr.rel (0) target = $region21
    $region20: #{tpu_custom_call.1} parent=1 // pred_region
      _
    $region21: #{tpu_custom_call.1} parent=1 // pred_fallthru
      _
    // Predicated region
    $region22: #{tpu_custom_call.1} parent=1 // pred_check
      _
    $region23: #{tpu_custom_call.1} parent=1 // pred_check_branch
      %26 = sbr.rel (0) target = $region25
    $region24: #{tpu_custom_call.1} parent=1 // pred_region
      _
    $region25: #{tpu_custom_call.1} parent=1 // pred_fallthru
      _
    %v27 = vld [vmem:[%s0] sm:$0xff]
    %v28 = vld [vmem:[%s0 + $0x8] sm:$0xff]
    %v29 = vld [vmem:[%s2] sm:$0xff]
    %v30 = vld [vmem:[%s2 + $0x8] sm:$0xff]
    %v31 = vld [vmem:[%s2 + $0x10] sm:$0xff]
    %v32 = vld [vmem:[%s2 + $0x18] sm:$0xff]
    %vm33 = vcmask 261120
    %v35 = vsel %vm33, %v27, 0
    %v38 = vsel %vm33, %v28, 0
    %40 = vmatprep.subr.mxu0 0.0
    %41 = vmatpush1.msra.mxu0 0.0
    %42 = vmatprep.subr.mxu0 0.0
    %43 = vmatpush1.msra.mxu0 0.0
    %44 = vmatprep.subr.mxu0 0.0
    %45 = vmatpush1.msra.mxu0 0.0
    %46 = vmatprep.subr.mxu0 0.0
    %47 = vmatpush1.msra.mxu0 0.0
    %48 = vmatprep.subr.mxu0 0.0
    %49 = vmatpush1.msra.mxu0 0.0
    %50 = vmatprep.subr.mxu0 0.0
    %51 = vmatpush1.msra.mxu0 0.0
    %52 = vmatprep.subr.mxu0 0.0
    %53 = vmatpush1.msra.mxu0 0.0
    %54 = vmatprep.subr.mxu0 0.0
    %55 = vmatpush1.msra.mxu0 0.0
    %56 = vmatprep.subr.mxu0 0.0
    %57 = vmatpush1.msra.mxu0 0.0
    %58 = vmatprep.subr.mxu0 0.0
    %59 = vmatpush1.msra.mxu0 0.0
    %60 = vmatprep.subr.mxu0 0.0
    %61 = vmatpush1.msra.mxu0 0.0
    %62 = vmatprep.subr.mxu0 0.0
    %63 = vmatpush1.msra.mxu0 0.0
    %64 = vmatprep.subr.mxu0 0.0
    %65 = vmatpush1.msra.mxu0 %v32
    %66 = vmatprep.subr.mxu0 0.0
    %67 = vmatpush1.msra.mxu0 %v31
    %68 = vmatprep.subr.mxu0 0.0
    %69 = vmatpush1.msra.mxu0 %v30
    %70 = vmatprep.subr.mxu0 0.0
    %71 = vmatpush1.msra.mxu0 %v29
    %72 = vmatprep.subr.mxu0 0.0
    %73 = vmatpush2.msra.mxu0 0.0
    %74 = vmatprep.subr.mxu0 0.0
    %75 = vmatpush2.msra.mxu0 0.0
    %76 = vmatprep.subr.mxu0 0.0
    %77 = vmatpush2.msra.mxu0 0.0
    %78 = vmatprep.subr.mxu0 0.0
    %79 = vmatpush2.msra.mxu0 0.0
    %80 = vmatprep.subr.mxu0 0.0
    %81 = vmatpush2.msra.mxu0 0.0
    %82 = vmatprep.subr.mxu0 0.0
    %83 = vmatpush2.msra.mxu0 0.0
    %84 = vmatprep.subr.mxu0 0.0
    %85 = vmatpush2.msra.mxu0 0.0
    %86 = vmatprep.subr.mxu0 0.0
    %87 = vmatpush2.msra.mxu0 0.0
    %88 = vmatprep.subr.mxu0 0.0
    %89 = vmatpush2.msra.mxu0 0.0
    %90 = vmatprep.subr.mxu0 0.0
    %91 = vmatpush2.msra.mxu0 0.0
    %92 = vmatprep.subr.mxu0 0.0
    %93 = vmatpush2.msra.mxu0 0.0
    %94 = vmatprep.subr.mxu0 0.0
    %95 = vmatpush2.msra.mxu0 0.0
    %96 = vmatprep.subr.mxu0 0.0
    %97 = vmatpush2.msra.mxu0 0.0
    %98 = vmatprep.subr.mxu0 0.0
    %99 = vmatpush2.msra.mxu0 0.0
    %100 = vmatprep.subr.mxu0 0.0
    %101 = vmatpush2.msra.mxu0 0.0
    %102 = vmatprep.subr.mxu0 0.0
    %103 = vmatpush2.msra.mxu0 0.0
    %104 = vmatprep.mubr.f32.mxu0 0.0
    %105 = vmatmul.mubr.f32.gmra.mxu0 %v35
    %v106 = vpop.f32.mrf.mxu0
    %v107 = vadd.f32 0.0, %v106
    %v108 = vpop.f32.mrf.mxu0
    %109 = vmatprep.mubr.f32.mxu0 0.0
    %110 = vmatmul.mubr.f32.gmra.mxu0 %v38
    %v111 = vpop.f32.mrf.mxu0
    %v112 = vadd.f32 0.0, %v111
    %v113 = vpop.f32.mrf.mxu0
    %114 = vdwg.mxu0
    %v115 = vld [vmem:[%s1] sm:$0x3]
    %v116 = vld [vmem:[%s3] sm:$0xff]
    %v117 = vld [vmem:[%s3 + $0x8] sm:$0xff]
    %v118 = vld [vmem:[%s3 + $0x10] sm:$0xff]
    %v119 = vld [vmem:[%s3 + $0x18] sm:$0xff]
    %v120 = vld [vmem:[%s4] sm:$0x1]
    %v122 = vlaneseq
    %v123 = vshrl.u32 %v122, 7
    %v124 = vsub.s32 0, %v123
    %v125 = vrot.slane %v120, %v124
    %v128 = vsel %vm33, %v115, 0
    %130 = vmatprep.subr.mxu0 0.0
    %131 = vmatpush1.msra.mxu0 0.0
    %132 = vmatprep.subr.mxu0 0.0
    %133 = vmatpush1.msra.mxu0 0.0
    %134 = vmatprep.subr.mxu0 0.0
    %135 = vmatpush1.msra.mxu0 0.0
    %136 = vmatprep.subr.mxu0 0.0
    %137 = vmatpush1.msra.mxu0 0.0
    %138 = vmatprep.subr.mxu0 0.0
    %139 = vmatpush1.msra.mxu0 0.0
    %140 = vmatprep.subr.mxu0 0.0
    %141 = vmatpush1.msra.mxu0 0.0
    %142 = vmatprep.subr.mxu0 0.0
    %143 = vmatpush1.msra.mxu0 0.0
    %144 = vmatprep.subr.mxu0 0.0
    %145 = vmatpush1.msra.mxu0 0.0
    %146 = vmatprep.subr.mxu0 0.0
    %147 = vmatpush1.msra.mxu0 0.0
    %148 = vmatprep.subr.mxu0 0.0
    %149 = vmatpush1.msra.mxu0 0.0
    %150 = vmatprep.subr.mxu0 0.0
    %151 = vmatpush1.msra.mxu0 0.0
    %152 = vmatprep.subr.mxu0 0.0
    %153 = vmatpush1.msra.mxu0 0.0
    %154 = vmatprep.subr.mxu0 0.0
    %155 = vmatpush1.msra.mxu0 %v119
    %156 = vmatprep.subr.mxu0 0.0
    %157 = vmatpush1.msra.mxu0 %v118
    %158 = vmatprep.subr.mxu0 0.0
    %159 = vmatpush1.msra.mxu0 %v117
    %160 = vmatprep.subr.mxu0 0.0
    %161 = vmatpush1.msra.mxu0 %v116
    %162 = vmatprep.subr.mxu0 0.0
    %163 = vmatpush2.msra.mxu0 0.0
    %164 = vmatprep.subr.mxu0 0.0
    %165 = vmatpush2.msra.mxu0 0.0
    %166 = vmatprep.subr.mxu0 0.0
    %167 = vmatpush2.msra.mxu0 0.0
    %168 = vmatprep.subr.mxu0 0.0
    %169 = vmatpush2.msra.mxu0 0.0
    %170 = vmatprep.subr.mxu0 0.0
    %171 = vmatpush2.msra.mxu0 0.0
    %172 = vmatprep.subr.mxu0 0.0
    %173 = vmatpush2.msra.mxu0 0.0
    %174 = vmatprep.subr.mxu0 0.0
    %175 = vmatpush2.msra.mxu0 0.0
    %176 = vmatprep.subr.mxu0 0.0
    %177 = vmatpush2.msra.mxu0 0.0
    %178 = vmatprep.subr.mxu0 0.0
    %179 = vmatpush2.msra.mxu0 0.0
    %180 = vmatprep.subr.mxu0 0.0
    %181 = vmatpush2.msra.mxu0 0.0
    %182 = vmatprep.subr.mxu0 0.0
    %183 = vmatpush2.msra.mxu0 0.0
    %184 = vmatprep.subr.mxu0 0.0
    %185 = vmatpush2.msra.mxu0 0.0
    %186 = vmatprep.subr.mxu0 0.0
    %187 = vmatpush2.msra.mxu0 0.0
    %188 = vmatprep.subr.mxu0 0.0
    %189 = vmatpush2.msra.mxu0 0.0
    %190 = vmatprep.subr.mxu0 0.0
    %191 = vmatpush2.msra.mxu0 0.0
    %192 = vmatprep.subr.mxu0 0.0
    %193 = vmatpush2.msra.mxu0 0.0
    %194 = vmatprep.mubr.f32.mxu0 0.0
    %195 = vmatmul.mubr.f32.gmra.mxu0 %v128
    %v196 = vpop.f32.mrf.mxu0
    %v197 = vadd.f32 %v125, %v196
    %v198 = vpop.f32.mrf.mxu0
    %199 = vdwg.mxu0
    %v202 = vunpack.c.l.s4 1966171168
    %v203 = vunpack.c.0.s8 %v202
    %v204 = vlaneseq
    %v205 = vshrl.u32 %v204, 7
    %v206 = vsub.s32 %v203, %v205
    %v207 = vrot.slane %v197, %v206
    %v208 = vcombine.high %v207, %v207
    %v210 = vunpack.c.l.s4 1966171168
    %v211 = vunpack.c.0.s8 %v210
    %v212 = vlaneseq
    %v213 = vshrl.u32 %v212, 7
    %v214 = vsub.s32 %v211, %v213
    %v215 = vrot.slane %v207, %v214
    %v217 = vunpack.c.l.s4 1966171168
    %v218 = vunpack.c.0.s8 %v217
    %v219 = vlaneseq
    %v220 = vshrl.u32 %v219, 7
    %v221 = vsub.s32 %v218, %v220
    %v222 = vrot.slane %v208, %v221
    %v223 = vlaneseq
    %v224 = vshrl.u32 %v223, 7
    %v225 = vsub.s32 0, %v224
    %v226 = vrot.slane %v215, %v225
    %v227 = vlaneseq
    %v228 = vshrl.u32 %v227, 7
    %v229 = vsub.s32 0, %v228
    %v230 = vrot.slane %v222, %v229
    %v233 = vadd.f32 %v107, %v226
    %v234 = vadd.f32 %v112, %v230
    %v235 = vtanh.pop %v233
    %v236 = vtanh.pop %v234
    %v237 = vld [vmem:[%s5] sm:$0x1]
    %v239 = vlaneseq
    %v240 = vshrl.u32 %v239, 7
    %v241 = vsub.s32 0, %v240
    %v242 = vrot.slane %v237, %v241
    %v244 = vmul.f32 %v235, %v242
    %v245 = vmul.f32 %v236, %v242
    %vm246 = vcmask 130048
    %v247 = vsel %vm246, %v244, 0.0
    %248 = vadd.xlane.f32.xlu0 %v247
    %v249 = vpop.xlane.xlu0 %248
    %v250 = vsel %vm246, %v245, 0.0
    %251 = vadd.xlane.f32.xlu0 %v250
    %v252 = vpop.xlane.xlu0 %251
    %v255 = vlaneseq
    %v256 = vand.u32 %v255, 127
    %v257 = vlaneseq
    %v258 = vshrl.u32 %v257, 7
    %v259 = vsub.s32 %v256, %v258
    %v260 = vrot.slane %v249, %v259
    %v261 = vlaneseq
    %v262 = vshrl.u32 %v261, 7
    %v263 = vsub.s32 %v256, %v262
    %v264 = vrot.slane %v252, %v263
    %vm265 = vcmask 1041409
    %v266 = vsel %vm265, %v264, %v260
    %vm268 = vcmask 58368
    %v269 = vsel %vm268, %v266, -inf
    %270 = vmax.xlane.f32.xlu0 %v269
    %v271 = vpop.xlane.xlu0 %270
    %v273 = vlaneseq
    %v274 = vshrl.u32 %v273, 7
    %v275 = vsub.s32 0, %v274
    %v276 = vrot.slane %v271, %v275
    %v277 = vlaneseq
    %v278 = vshrl.u32 %v277, 7
    %v279 = vsub.s32 1, %v278
    %v280 = vrot.slane %v271, %v279
    %v283 = vsub.f32 %v249, %v276
    %v284 = vsub.f32 %v252, %v280
    %v285 = vmul.f32 %v283, 1.442695
    %v286 = vpow.pop %v285
    %v287 = vmul.f32 %v284, 1.442695
    %v288 = vpow.pop %v287
    %291 = vset.pattern.permute.xlu0 0
    %292 = vperm.xlu0 %291, %v286
    %v293 = vpop.permute.xlu0 %292
    %294 = vset.pattern.permute.xlu0 0
    %295 = vperm.xlu0 %294, %v288
    %v296 = vpop.permute.xlu0 %295
    %v297 = vlaneseq
    %v298 = vshrl.u32 %v297, 7
    %v299 = vsub.s32 %v256, %v298
    %v300 = vrot.slane %v293, %v299
    %v301 = vlaneseq
    %v302 = vshrl.u32 %v301, 7
    %v303 = vsub.s32 %v256, %v302
    %v304 = vrot.slane %v296, %v303
    %v305 = vsel %vm265, %v304, %v300
    %v307 = vsel %vm268, %v305, 0.0
    %308 = vadd.xlane.f32.xlu0 %v307
    %v309 = vpop.xlane.xlu0 %308
    %v310 = vrcp.pop %v309
    %v311 = vmul.f32 %v309, %v310
    %v312 = vsub.f32 2.0, %v311
    %v313 = vmul.f32 %v310, %v312
    %v315 = vlaneseq
    %v316 = vshrl.u32 %v315, 7
    %v317 = vsub.s32 0, %v316
    %v318 = vrot.slane %v313, %v317
    %v319 = vlaneseq
    %v320 = vshrl.u32 %v319, 7
    %v321 = vsub.s32 1, %v320
    %v322 = vrot.slane %v313, %v321
    %v325 = vmul.f32 %v286, %v318
    %v326 = vmul.f32 %v288, %v322
    %328 = vset.pattern.permute.xlu0 0
    %329 = vperm.xlu0 %328, %v325
    %v330 = vpop.permute.xlu0 %329
    %333 = vset.pattern.permute.xlu0 0
    %334 = vperm.xlu0 %333, %v326
    %v335 = vpop.permute.xlu0 %334
    %v337 = vmul.f32 %v330, %v27
    %v338 = vmul.f32 %v335, %v28
    %v339 = vsel %vm33, %v337, 0.0
    %v340 = vrot.slane %v339, 4
    %v341 = vadd.f32 %v339, %v340
    %v342 = vrot.slane %v341, 2
    %v343 = vadd.f32 %v341, %v342
    %v344 = vrot.slane %v343, 1
    %v345 = vadd.f32 %v343, %v344
    %v346 = vsel %vm33, %v338, 0.0
    %v347 = vrot.slane %v346, 4
    %v348 = vadd.f32 %v346, %v347
    %v349 = vrot.slane %v348, 2
    %v350 = vadd.f32 %v348, %v349
    %v351 = vrot.slane %v350, 1
    %v352 = vadd.f32 %v350, %v351
    %v355 = vsel %vm265, %v352, %v345
    %v357 = vsel %vm33, %v355, 0.0
    %358 = vst [vmem:[#allocation2] sm:$0x3] %v357
    %v359 = vlaneseq
    %v360 = vshrl.u32 %v359, 7
    %v361 = vsub.s32 %v256, %v360
    %v362 = vrot.slane %v330, %v361
    %v363 = vlaneseq
    %v364 = vshrl.u32 %v363, 7
    %v365 = vsub.s32 %v256, %v364
    %v366 = vrot.slane %v335, %v365
    %v367 = vsel %vm265, %v366, %v362
    %vm369 = vcmask 64512
    %v370 = vsel %vm369, %v367, 0.0
    %371 = vst [vmem:[#allocation4] sm:$0x3] %v370
    // Predicated region
    $region26: #{tpu_custom_call.1} parent=1 // pred_check
      _
    $region27: #{tpu_custom_call.1} parent=1 // pred_check_branch
      %373 = sbr.rel (0) target = $region29
    $region28: #{tpu_custom_call.1} parent=1 // pred_region
      %s375 = ssub.s32 32, 32
      %376 = vsyncadd [#allocation3], %s375
      %s378 = sshll.u32 [#allocation2], 4
      %s379 = int_to_ptr.vmem [resolvable:$true] %s378
      %381 = dma.vmem_to_hbm [thread:$0]  %s379, 32, %s6, [#allocation3]
    $region29: #{tpu_custom_call.1} parent=1 // pred_fallthru
      _
    // Predicated region
    $region30: #{tpu_custom_call.1} parent=1 // pred_check
      _
    $region31: #{tpu_custom_call.1} parent=1 // pred_check_branch
      %383 = sbr.rel (0) target = $region33
    $region32: #{tpu_custom_call.1} parent=1 // pred_region
      %s385 = ssub.s32 32, 32
      %386 = vsyncadd [#allocation5], %s385
      %s388 = sshll.u32 [#allocation4], 4
      %s389 = int_to_ptr.vmem [resolvable:$true] %s388
      %391 = dma.vmem_to_hbm [thread:$0]  %s389, 32, %s7, [#allocation5]
    $region33: #{tpu_custom_call.1} parent=1 // pred_fallthru
      _
    // Predicated region
    $region34: #{tpu_custom_call.1} parent=1 // pred_check
      _
    $region35: #{tpu_custom_call.1} parent=1 // pred_check_branch
      %393 = sbr.rel (0) target = $region37
    $region36: #{tpu_custom_call.1} parent=1 // pred_region
      %394 = dma.done [#allocation3], 32
    $region37: #{tpu_custom_call.1} parent=1 // pred_fallthru
      _
    // Predicated region
    $region38: #{tpu_custom_call.1} parent=1 // pred_check
      _
    $region39: #{tpu_custom_call.1} parent=1 // pred_check_branch
      %396 = sbr.rel (0) target = $region41
    $region40: #{tpu_custom_call.1} parent=1 // pred_region
      %397 = dma.done [#allocation5], 32
    $region41: #{tpu_custom_call.1} parent=1 // pred_fallthru
      _
    %398 = vsyncpa [#allocation3], 1
    %399 = vsyncpa [#allocation5], 1

</llo_original>
